<compile_context>
chip_gen: v7x
topology: tpu7x:2x2x1
jax: 0.10.0
libtpu: 0.0.40
codegen_flags: <defaults>
</compile_context>

<pallas_src>
import math

import jax
import jax.numpy as jnp
from jax.experimental import pallas as pl
from jax.experimental.pallas import tpu as pltpu

_MIB = 1 << 20
# Per-buffer cap for the streamed adjacency block (it is double-buffered);
# chosen so the kernel stays well inside v7x's 64 MiB physical VMEM.
_ADJ_BUF_BUDGET = 4 * _MIB
# Budget for keeping the whole (padded, bf16) feature matrix VMEM-resident.
_X_RESIDENT_BUDGET = 8 * _MIB


def _round_up(x, m):
    return ((x + m - 1) // m) * m


def _tile_candidates(n_pad, cap=1024):
    """Multiples of 128 that divide n_pad, descending, capped at `cap`."""
    cands = []
    t = min(cap, n_pad)
    t -= t % 128
    while t >= 128:
        if n_pad % t == 0:
            cands.append(t)
        t -= 128
    return cands  # non-empty: 128 always divides n_pad


# ---------------------------------------------------------------------------
# Kernels
# ---------------------------------------------------------------------------

def _gcn_kernel_resident(adj_ref, x_ref, w_ref, b_ref, o_ref):
    """1-D grid over row tiles; x / weight / bias stay resident in VMEM.

    adj_ref : (tm, n_pad)        row slab of the adjacency (f32 or bf16)
    x_ref   : (n_pad, f_in_pad)  bf16, constant index_map (fetched once)
    w_ref   : (f_in_pad, f_out_pad) bf16, constant index_map
    b_ref   : (1, f_out_pad)     f32
    o_ref   : (tm, f_out_pad)    f32, lane-dense
    """
    # Big matmul against the *narrow* feature matrix: bf16 on the MXU, f32
    # accumulation.  astype is a no-op if adj was pre-cast during padding.
    t = jnp.dot(adj_ref[...].astype(jnp.bfloat16), x_ref[...],
                preferred_element_type=jnp.float32)
    # Small per-row-tile projection, also bf16 (no native f32 MXU path).
    out = jnp.dot(t.astype(jnp.bfloat16), w_ref[...],
                  preferred_element_type=jnp.float32)
    o_ref[...] = (out + b_ref[...]).astype(o_ref.dtype)


def _gcn_kernel_tiled(adj_ref, x_ref, w_ref, b_ref, o_ref, acc_ref):
    """Fallback: 2-D grid (row tiles i, node-reduction tiles k), f32 accumulator."""
    k = pl.program_id(1)

    @pl.when(k == 0)
    def _():
        acc_ref[...] = jnp.zeros_like(acc_ref)

    acc_ref[...] += jnp.dot(adj_ref[...].astype(jnp.bfloat16), x_ref[...],
                            preferred_element_type=jnp.float32)

    @pl.when(k == pl.num_programs(1) - 1)
    def _():
        out = jnp.dot(acc_ref[...].astype(jnp.bfloat16), w_ref[...],
                      preferred_element_type=jnp.float32)
        o_ref[...] = (out + b_ref[...]).astype(o_ref.dtype)


# ---------------------------------------------------------------------------
# Wrapper
# ---------------------------------------------------------------------------

def gcn_forward(x, adj, weight, bias):
    n, f_in = x.shape
    f_out = weight.shape[1]

    # Keep feature dims at 128-multiples (do not force 256 -- memory-bound).
    f_in_pad = _round_up(f_in, 128)
    f_out_pad = _round_up(f_out, 128)
    n_pad = _round_up(n, 128)

    # --- adjacency: avoid a separate pad+cast pre-pass over the N^2 operand --
    if n_pad == n:
        adj_p = adj  # no copy; stream f32 and cast each tile in-kernel
    else:
        # padding copy is unavoidable -> fold the bf16 cast into it
        adj_p = jnp.pad(adj, ((0, n_pad - n), (0, n_pad - n))).astype(jnp.bfloat16)
    adj_itemsize = adj_p.dtype.itemsize

    # x / weight / bias are small: pad + cast (negligible traffic).  Zero
    # padding along the node axis makes padded adjacency columns contribute 0.
    x_p = jnp.pad(x, ((0, n_pad - n), (0, f_in_pad - f_in))).astype(jnp.bfloat16)
    w_p = jnp.pad(weight, ((0, f_in_pad - f_in), (0, f_out_pad - f_out))).astype(jnp.bfloat16)
    b_p = jnp.pad(bias.reshape(1, f_out),
                  ((0, 0), (0, f_out_pad - f_out))).astype(jnp.float32)

    x_bytes = n_pad * f_in_pad * 2
    cands = _tile_candidates(n_pad, cap=1024)

    # Prefer the collapsed-reduction (resident-x) path: largest row tile whose
    # full-row adjacency slab fits the per-buffer budget.
    tm_res = next((t for t in cands
                   if t * n_pad * adj_itemsize <= _ADJ_BUF_BUDGET), None)
    use_resident = (x_bytes <= _X_RESIDENT_BUDGET) and (tm_res is not None)

    flops = 2 * n * n * f_in + 2 * n * f_in * f_out
    bytes_accessed = (adj_p.size * adj_itemsize + x_p.size * 2 + w_p.size * 2
                      + b_p.size * 4 + n_pad * f_out_pad * 4)
    cost = pl.CostEstimate(flops=flops, transcendentals=0,
                           bytes_accessed=bytes_accessed)

    out_shape = jax.ShapeDtypeStruct((n_pad, f_out_pad), jnp.float32)
    w_bytes = f_in_pad * f_out_pad * 2
    b_bytes = f_out_pad * 4

    if use_resident:
        tm = tm_res
        vmem_est = (2 * tm * n_pad * adj_itemsize   # double-buffered adj slab
                    + x_bytes                        # resident x
                    + 2 * tm * f_out_pad * 4         # double-buffered output
                    + tm * f_in_pad * 4              # intermediate t
                    + w_bytes + b_bytes)
        grid_spec = pltpu.PrefetchScalarGridSpec(
            num_scalar_prefetch=0,
            grid=(n_pad // tm,),
            in_specs=[
                pl.BlockSpec((tm, n_pad), lambda i: (i, 0)),           # adj slab
                pl.BlockSpec((n_pad, f_in_pad), lambda i: (0, 0)),     # x (resident)
                pl.BlockSpec((f_in_pad, f_out_pad), lambda i: (0, 0)),  # weight
                pl.BlockSpec((1, f_out_pad), lambda i: (0, 0)),        # bias
            ],
            out_specs=pl.BlockSpec((tm, f_out_pad), lambda i: (i, 0)),
        )
        kernel = _gcn_kernel_resident
        dim_sem = ("parallel",)
    else:
        # Huge-graph fallback: tile the reduction axis, accumulate in f32.
        tm = tk = cands[0]
        vmem_est = (2 * tm * tk * adj_itemsize
                    + 2 * tk * f_in_pad * 2
                    + 2 * tm * f_out_pad * 4
                    + tm * f_in_pad * 4              # accumulator
                    + w_bytes + b_bytes)
        grid_spec = pltpu.PrefetchScalarGridSpec(
            num_scalar_prefetch=0,
            grid=(n_pad // tm, n_pad // tk),
            in_specs=[
                pl.BlockSpec((tm, tk), lambda i, k: (i, k)),
                pl.BlockSpec((tk, f_in_pad), lambda i, k: (k, 0)),
                pl.BlockSpec((f_in_pad, f_out_pad), lambda i, k: (0, 0)),
                pl.BlockSpec((1, f_out_pad), lambda i, k: (0, 0)),
            ],
            out_specs=pl.BlockSpec((tm, f_out_pad), lambda i, k: (i, 0)),
            scratch_shapes=[pltpu.VMEM((tm, f_in_pad), jnp.float32)],
        )
        kernel = _gcn_kernel_tiled
        dim_sem = ("parallel", "arbitrary")

    # Explicit VMEM limit (v7x has only 64 MiB physical): actual need + headroom.
    vmem_limit = int(min(max(vmem_est * 5 // 4 + 2 * _MIB, 16 * _MIB), 48 * _MIB))

    out_padded = pl.pallas_call(
        kernel,
        out_shape=out_shape,
        grid_spec=grid_spec,
        compiler_params=pltpu.CompilerParams(
            dimension_semantics=dim_sem,
            vmem_limit_bytes=vmem_limit,
        ),
        cost_estimate=cost,
    )(adj_p, x_p, w_p, b_p)

    return out_padded[:n, :f_out]


if __name__ == "__main__":
    # Shapes consistent with the module's forward: N nodes, in/out features.
    N, F_IN, F_OUT = 8, 16, 32

    key = jax.random.PRNGKey(0)
    k_x, k_adj, k_w, k_b = jax.random.split(key, 4)

    # Inputs
    x = jax.random.normal(k_x, (N, F_IN), dtype=jnp.float32)
    # Dense "sparse" adjacency: random 0/1 mask + self-loops, row-normalized.
    adj_raw = (jax.random.uniform(k_adj, (N, N)) < 0.3).astype(jnp.float32)
    adj_raw = adj_raw + jnp.eye(N, dtype=jnp.float32)
    adj = adj_raw / jnp.sum(adj_raw, axis=1, keepdims=True)

    # Parameters, init like reset_parameters(): U(-stdv, stdv), stdv = 1/sqrt(out_features)
    stdv = 1.0 / math.sqrt(F_OUT)
    weight = jax.random.uniform(
        k_w, (F_IN, F_OUT), dtype=jnp.float32, minval=-stdv, maxval=stdv
    )
    bias = jax.random.uniform(
        k_b, (F_OUT,), dtype=jnp.float32, minval=-stdv, maxval=stdv
    )

    fwd = jax.jit(gcn_forward)
    out = jax.block_until_ready(fwd(x, adj, weight, bias))

    # Reference in full f32.  Both kernel matmuls use bf16 operands with f32
    # accumulation (per perf review), so tolerance reflects bf16 input rounding.
    ref = adj @ (x @ weight) + bias[None, :]
    assert out.shape == (N, F_OUT)
    assert jnp.allclose(out, ref, atol=2e-2, rtol=2e-2), (
        float(jnp.max(jnp.abs(out - ref)))
    )

    print("KERNEL_OK")
</pallas_src>

<mosaic_0001>
module attributes {stable_mosaic.version = 11 : i64} {
  func.func @_gcn_kernel_resident(%arg0: i32, %arg1: memref<128x128xbf16, #tpu.memory_space<vmem>>, %arg2: memref<128x128xbf16, #tpu.memory_space<vmem>>, %arg3: memref<128x128xbf16, #tpu.memory_space<vmem>>, %arg4: memref<1x128xf32, #tpu.memory_space<vmem>>, %arg5: memref<128x128xf32, #tpu.memory_space<vmem>>) attributes {dimension_semantics = [#tpu.dimension_semantics<parallel>], iteration_bounds = array<i64: 1>, scalar_prefetch = 0 : i64, scratch_operands = 0 : i64, tpu.core_type = #tpu.core_type<tc>, window_params = [{transform_indices = @transform_0, window_bounds = array<i64: 128, 128>}, {pipeline_mode = #tpu.pipeline_mode<synchronous>, transform_indices = @transform_1, window_bounds = array<i64: 128, 128>}, {pipeline_mode = #tpu.pipeline_mode<synchronous>, transform_indices = @transform_2, window_bounds = array<i64: 128, 128>}, {pipeline_mode = #tpu.pipeline_mode<synchronous>, transform_indices = @transform_3, window_bounds = array<i64: 1, 128>}, {transform_indices = @transform_4, window_bounds = array<i64: 128, 128>}]} {
    %c0 = arith.constant 0 : index
    %c0_0 = arith.constant 0 : index
    %0 = vector.load %arg1[%c0, %c0_0] : memref<128x128xbf16, #tpu.memory_space<vmem>>, vector<128x128xbf16>
    %c0_1 = arith.constant 0 : index
    %c0_2 = arith.constant 0 : index
    %1 = vector.load %arg2[%c0_1, %c0_2] : memref<128x128xbf16, #tpu.memory_space<vmem>>, vector<128x128xbf16>
    %cst = arith.constant dense<0.000000e+00> : vector<128x128xf32>
    %2 = tpu.matmul %0, %1, %cst {dimension_numbers = #tpu.dot_dimension_numbers<[1], [0], [0], [1], [0, 0, 1, 1], [], []>} : vector<128x128xbf16>, vector<128x128xbf16>, vector<128x128xf32> -> vector<128x128xf32>
    %3 = arith.truncf %2 : vector<128x128xf32> to vector<128x128xbf16>
    %c0_3 = arith.constant 0 : index
    %c0_4 = arith.constant 0 : index
    %4 = vector.load %arg3[%c0_3, %c0_4] : memref<128x128xbf16, #tpu.memory_space<vmem>>, vector<128x128xbf16>
    %cst_5 = arith.constant dense<0.000000e+00> : vector<128x128xf32>
    %5 = tpu.matmul %3, %4, %cst_5 {dimension_numbers = #tpu.dot_dimension_numbers<[1], [0], [0], [1], [0, 0, 1, 1], [], []>} : vector<128x128xbf16>, vector<128x128xbf16>, vector<128x128xf32> -> vector<128x128xf32>
    %c0_6 = arith.constant 0 : index
    %c0_7 = arith.constant 0 : index
    %6 = vector.load %arg4[%c0_6, %c0_7] : memref<1x128xf32, #tpu.memory_space<vmem>>, vector<1x128xf32>
    %7 = vector.broadcast %6 : vector<1x128xf32> to vector<128x128xf32>
    %8 = arith.addf %5, %7 : vector<128x128xf32>
    %c0_8 = arith.constant 0 : index
    %c0_9 = arith.constant 0 : index
    %9 = vector.load %arg5[%c0_8, %c0_9] : memref<128x128xf32, #tpu.memory_space<vmem>>, vector<128x128xf32>
    tpu.vector_store %arg5[%c0_8, %c0_9], %8 {strides = array<i32>} : memref<128x128xf32, #tpu.memory_space<vmem>>, vector<128x128xf32>,
    return
  }
  func.func @transform_0(%arg0: i32) -> (i32, i32) {
    %c0_i32 = arith.constant 0 : i32
    %c0_i32_0 = arith.constant 0 : i32
    return %arg0, %c0_i32 : i32, i32
  }
  func.func @transform_1(%arg0: i32) -> (i32, i32) {
    %c0_i32 = arith.constant 0 : i32
    %c0_i32_0 = arith.constant 0 : i32
    %c0_i32_1 = arith.constant 0 : i32
    return %c0_i32, %c0_i32_0 : i32, i32
  }
  func.func @transform_2(%arg0: i32) -> (i32, i32) {
    %c0_i32 = arith.constant 0 : i32
    %c0_i32_0 = arith.constant 0 : i32
    %c0_i32_1 = arith.constant 0 : i32
    return %c0_i32, %c0_i32_0 : i32, i32
  }
  func.func @transform_3(%arg0: i32) -> (i32, i32) {
    %c0_i32 = arith.constant 0 : i32
    %c0_i32_0 = arith.constant 0 : i32
    %c0_i32_1 = arith.constant 0 : i32
    return %c0_i32, %c0_i32_0 : i32, i32
  }
  func.func @transform_4(%arg0: i32) -> (i32, i32) {
    %c0_i32 = arith.constant 0 : i32
    %c0_i32_0 = arith.constant 0 : i32
    return %arg0, %c0_i32 : i32, i32
  }
}

</mosaic_0001>

<llo_original>
// kernel: gcn_forward.1
$region0: #{gcn_forward.1}
  #allocation0 [shape = 'u32[]', space=smem, size = 0x4, offset = 0x4, fixed_abs, tag = 'smem constant byte address 0x4 - core index']
  #allocation1 [shape = 'u32[144,128]{1,0:T(1,128)}', space=vmem, size = 0x12000, scoped, tag = 'internal scratch']
  %s0 = inlined_call_operand.vmem [shape: bf16[128,128], index: 0, kind: input, shape index: {}]
  %s1 = inlined_call_operand.vmem [shape: bf16[128,128], index: 1, kind: input, shape index: {}]
  %s2 = inlined_call_operand.vmem [shape: bf16[128,128], index: 2, kind: input, shape index: {}]
  %s3 = inlined_call_operand.vmem [shape: f32[1,128], index: 3, kind: input, shape index: {}]
  %s4 = inlined_call_operand.vmem [shape: f32[128,128], index: 4, kind: output, shape index: {}]
  %s5 = sld [smem:[#allocation0]]
  $region26: #{gcn_forward.1} parent=0
    _
  %s7 = ssub.s32 1, %s5
  %s8 = scalar_select 0, %s7, %s5
  // Predicated region
  $region2: #{gcn_forward.1} parent=0 // pred_check
    _
  $region3: #{gcn_forward.1} parent=0 // pred_check_branch
    %10 = sbr.rel (0) target = $region5
  $region4: #{gcn_forward.1} parent=0 // pred_region
    _
  $region5: #{gcn_forward.1} parent=0 // pred_fallthru
    _
  // Predicated region
  $region6: #{gcn_forward.1} parent=0 // pred_check
    _
  $region7: #{gcn_forward.1} parent=0 // pred_check_branch
    %12 = sbr.rel (0) target = $region9
  $region8: #{gcn_forward.1} parent=0 // pred_region
    _
  $region9: #{gcn_forward.1} parent=0 // pred_fallthru
    _
  // Predicated region
  $region10: #{gcn_forward.1} parent=0 // pred_check
    _
  $region11: #{gcn_forward.1} parent=0 // pred_check_branch
    %14 = sbr.rel (0) target = $region13
  $region12: #{gcn_forward.1} parent=0 // pred_region
    _
  $region13: #{gcn_forward.1} parent=0 // pred_fallthru
    _
  // Predicated region
  $region14: #{gcn_forward.1} parent=0 // pred_check
    _
  $region15: #{gcn_forward.1} parent=0 // pred_check_branch
    %16 = sbr.rel (0) target = $region17
  $region16: #{gcn_forward.1} parent=0 // pred_region
    _
  $region17: #{gcn_forward.1} parent=0 // pred_fallthru
    _
  %v18 = vld [vmem:[%s0] sm:$0xf]
  %v19 = vld [vmem:[%s0 + $0x4] sm:$0xf]
  %v20 = vld [vmem:[%s0 + $0x8] sm:$0xf]
  %v21 = vld [vmem:[%s0 + $0xc] sm:$0xf]
  %v22 = vld [vmem:[%s0 + $0x10] sm:$0xf]
  %v23 = vld [vmem:[%s0 + $0x14] sm:$0xf]
  %v24 = vld [vmem:[%s0 + $0x18] sm:$0xf]
  %v25 = vld [vmem:[%s0 + $0x1c] sm:$0xf]
  %v26 = vld [vmem:[%s0 + $0x20] sm:$0xf]
  %v27 = vld [vmem:[%s0 + $0x24] sm:$0xf]
  %v28 = vld [vmem:[%s0 + $0x28] sm:$0xf]
  %v29 = vld [vmem:[%s0 + $0x2c] sm:$0xf]
  %v30 = vld [vmem:[%s0 + $0x30] sm:$0xf]
  %v31 = vld [vmem:[%s0 + $0x34] sm:$0xf]
  %v32 = vld [vmem:[%s0 + $0x38] sm:$0xf]
  %v33 = vld [vmem:[%s0 + $0x3c] sm:$0xf]
  %v34 = vld [vmem:[%s1] sm:$0xf]
  %v35 = vld [vmem:[%s1 + $0x4] sm:$0xf]
  %v36 = vld [vmem:[%s1 + $0x8] sm:$0xf]
  %v37 = vld [vmem:[%s1 + $0xc] sm:$0xf]
  %v38 = vld [vmem:[%s1 + $0x10] sm:$0xf]
  %v39 = vld [vmem:[%s1 + $0x14] sm:$0xf]
  %v40 = vld [vmem:[%s1 + $0x18] sm:$0xf]
  %v41 = vld [vmem:[%s1 + $0x1c] sm:$0xf]
  %v42 = vld [vmem:[%s1 + $0x20] sm:$0xf]
  %v43 = vld [vmem:[%s1 + $0x24] sm:$0xf]
  %v44 = vld [vmem:[%s1 + $0x28] sm:$0xf]
  %v45 = vld [vmem:[%s1 + $0x2c] sm:$0xf]
  %v46 = vld [vmem:[%s1 + $0x30] sm:$0xf]
  %v47 = vld [vmem:[%s1 + $0x34] sm:$0xf]
  %v48 = vld [vmem:[%s1 + $0x38] sm:$0xf]
  %v49 = vld [vmem:[%s1 + $0x3c] sm:$0xf]
  %v66 = vunpack.c.l.b16 %v18
  %v67 = vunpack.c.l.b16 %v19
  %v68 = vunpack.c.l.b16 %v20
  %v69 = vunpack.c.l.b16 %v21
  %v70 = vunpack.c.l.b16 %v22
  %v71 = vunpack.c.l.b16 %v23
  %v72 = vunpack.c.l.b16 %v24
  %v73 = vunpack.c.l.b16 %v25
  %v74 = vunpack.c.l.b16 %v26
  %v75 = vunpack.c.l.b16 %v27
  %v76 = vunpack.c.l.b16 %v28
  %v77 = vunpack.c.l.b16 %v29
  %v78 = vunpack.c.l.b16 %v30
  %v79 = vunpack.c.l.b16 %v31
  %v80 = vunpack.c.l.b16 %v32
  %v81 = vunpack.c.l.b16 %v33
  %v82 = vpack.c.b16 %v67, %v66
  %v83 = vpack.c.b16 %v69, %v68
  %v84 = vpack.c.b16 %v71, %v70
  %v85 = vpack.c.b16 %v73, %v72
  %v86 = vpack.c.b16 %v75, %v74
  %v87 = vpack.c.b16 %v77, %v76
  %v88 = vpack.c.b16 %v79, %v78
  %v89 = vpack.c.b16 %v81, %v80
  %v114 = vunpack.c.l.b16 %v34
  %v115 = vunpack.c.l.b16 %v35
  %v116 = vunpack.c.l.b16 %v36
  %v117 = vunpack.c.l.b16 %v37
  %v118 = vunpack.c.l.b16 %v38
  %v119 = vunpack.c.l.b16 %v39
  %v120 = vunpack.c.l.b16 %v40
  %v121 = vunpack.c.l.b16 %v41
  %v122 = vunpack.c.l.b16 %v42
  %v123 = vunpack.c.l.b16 %v43
  %v124 = vunpack.c.l.b16 %v44
  %v125 = vunpack.c.l.b16 %v45
  %v126 = vunpack.c.l.b16 %v46
  %v127 = vunpack.c.l.b16 %v47
  %v128 = vunpack.c.l.b16 %v48
  %v129 = vunpack.c.l.b16 %v49
  %v130 = vpack.c.b16 %v115, %v114
  %v131 = vpack.c.b16 %v117, %v116
  %v132 = vpack.c.b16 %v119, %v118
  %v133 = vpack.c.b16 %v121, %v120
  %v134 = vpack.c.b16 %v123, %v122
  %v135 = vpack.c.b16 %v125, %v124
  %v136 = vpack.c.b16 %v127, %v126
  %v137 = vpack.c.b16 %v129, %v128
  %146 = vmatprep.subr.bf16.mxu0 0
  %147 = vmatpush1.bf16.msra.mxu0 %v130
  %148 = vmatprep.subr.bf16.mxu0 0
  %149 = vmatpush1.bf16.msra.mxu0 %v131
  %150 = vmatprep.subr.bf16.mxu0 0
  %151 = vmatpush1.bf16.msra.mxu0 %v132
  %152 = vmatprep.subr.bf16.mxu0 0
  %153 = vmatpush1.bf16.msra.mxu0 %v133
  %154 = vmatprep.subr.bf16.mxu0 0
  %155 = vmatpush1.bf16.msra.mxu0 %v134
  %156 = vmatprep.subr.bf16.mxu0 0
  %157 = vmatpush1.bf16.msra.mxu0 %v135
  %158 = vmatprep.subr.bf16.mxu0 0
  %159 = vmatpush1.bf16.msra.mxu0 %v136
  %160 = vmatprep.subr.bf16.mxu0 0
  %161 = vmatpush1.bf16.msra.mxu0 %v137
  %162 = vmatprep.subr.bf16.mxu0 0
  %163 = vmatpush1.bf16.msra.mxu0 0
  %164 = vmatprep.subr.bf16.mxu0 0
  %165 = vmatpush1.bf16.msra.mxu0 0
  %166 = vmatprep.subr.bf16.mxu0 0
  %167 = vmatpush1.bf16.msra.mxu0 0
  %168 = vmatprep.subr.bf16.mxu0 0
  %169 = vmatpush1.bf16.msra.mxu0 0
  %170 = vmatprep.subr.bf16.mxu0 0
  %171 = vmatpush1.bf16.msra.mxu0 0
  %172 = vmatprep.subr.bf16.mxu0 0
  %173 = vmatpush1.bf16.msra.mxu0 0
  %174 = vmatprep.subr.bf16.mxu0 0
  %175 = vmatpush1.bf16.msra.mxu0 0
  %176 = vmatprep.subr.bf16.mxu0 0
  %177 = vmatpush1.bf16.msra.mxu0 0
  %178 = vmatprep.mubr.bf16.mxu0 0
  %179 = vmatmul.mubr.bf16.gmra.mrb[0].mxu0 %v82
  %v180 = vpop.f32.mrb[0].mxu0
  %v181 = vadd.f32 0.0, %v180
  %v182 = vpop.f32.mrb[0].mxu0
  %v183 = vpop.f32.mrb[0].mxu0
  %v184 = vadd.f32 0.0, %v183
  %v185 = vpop.f32.mrb[0].mxu0
  %186 = vmatprep.mubr.bf16.mxu0 0
  %187 = vmatmul.mubr.bf16.gmra.mrb[0].mxu0 %v83
  %v188 = vpop.f32.mrb[0].mxu0
  %v189 = vadd.f32 0.0, %v188
  %v190 = vpop.f32.mrb[0].mxu0
  %v191 = vpop.f32.mrb[0].mxu0
  %v192 = vadd.f32 0.0, %v191
  %v193 = vpop.f32.mrb[0].mxu0
  %194 = vmatprep.mubr.bf16.mxu0 0
  %195 = vmatmul.mubr.bf16.gmra.mrb[0].mxu0 %v84
  %v196 = vpop.f32.mrb[0].mxu0
  %v197 = vadd.f32 0.0, %v196
  %v198 = vpop.f32.mrb[0].mxu0
  %v199 = vpop.f32.mrb[0].mxu0
  %v200 = vadd.f32 0.0, %v199
  %v201 = vpop.f32.mrb[0].mxu0
  %202 = vmatprep.mubr.bf16.mxu0 0
  %203 = vmatmul.mubr.bf16.gmra.mrb[0].mxu0 %v85
  %v204 = vpop.f32.mrb[0].mxu0
  %v205 = vadd.f32 0.0, %v204
  %v206 = vpop.f32.mrb[0].mxu0
  %v207 = vpop.f32.mrb[0].mxu0
  %v208 = vadd.f32 0.0, %v207
  %v209 = vpop.f32.mrb[0].mxu0
  %210 = vmatprep.mubr.bf16.mxu0 0
  %211 = vmatmul.mubr.bf16.gmra.mrb[0].mxu0 %v86
  %v212 = vpop.f32.mrb[0].mxu0
  %v213 = vadd.f32 0.0, %v212
  %v214 = vpop.f32.mrb[0].mxu0
  %v215 = vpop.f32.mrb[0].mxu0
  %v216 = vadd.f32 0.0, %v215
  %v217 = vpop.f32.mrb[0].mxu0
  %218 = vmatprep.mubr.bf16.mxu0 0
  %219 = vmatmul.mubr.bf16.gmra.mrb[0].mxu0 %v87
  %v220 = vpop.f32.mrb[0].mxu0
  %v221 = vadd.f32 0.0, %v220
  %v222 = vpop.f32.mrb[0].mxu0
  %v223 = vpop.f32.mrb[0].mxu0
  %v224 = vadd.f32 0.0, %v223
  %v225 = vpop.f32.mrb[0].mxu0
  %226 = vmatprep.mubr.bf16.mxu0 0
  %227 = vmatmul.mubr.bf16.gmra.mrb[0].mxu0 %v88
  %v228 = vpop.f32.mrb[0].mxu0
  %v229 = vadd.f32 0.0, %v228
  %v230 = vpop.f32.mrb[0].mxu0
  %v231 = vpop.f32.mrb[0].mxu0
  %v232 = vadd.f32 0.0, %v231
  %v233 = vpop.f32.mrb[0].mxu0
  %234 = vmatprep.mubr.bf16.mxu0 0
  %235 = vmatmul.mubr.bf16.gmra.mrb[0].mxu0 %v89
  %v236 = vpop.f32.mrb[0].mxu0
  %v237 = vadd.f32 0.0, %v236
  %v238 = vpop.f32.mrb[0].mxu0
  %v239 = vpop.f32.mrb[0].mxu0
  %v240 = vadd.f32 0.0, %v239
  %v241 = vpop.f32.mrb[0].mxu0
  %242 = vdwg.mxu0
  %v243 = vpack.c.bf16 %v184, %v181
  %v244 = vpack.c.bf16 %v192, %v189
  %v245 = vpack.c.bf16 %v200, %v197
  %v246 = vpack.c.bf16 %v208, %v205
  %v247 = vpack.c.bf16 %v216, %v213
  %v248 = vpack.c.bf16 %v224, %v221
  %v249 = vpack.c.bf16 %v232, %v229
  %v250 = vpack.c.bf16 %v240, %v237
  %v251 = vld [vmem:[%s2] sm:$0xf]
  %v252 = vld [vmem:[%s2 + $0x4] sm:$0xf]
  %v253 = vld [vmem:[%s2 + $0x8] sm:$0xf]
  %v254 = vld [vmem:[%s2 + $0xc] sm:$0xf]
  %v255 = vld [vmem:[%s2 + $0x10] sm:$0xf]
  %v256 = vld [vmem:[%s2 + $0x14] sm:$0xf]
  %v257 = vld [vmem:[%s2 + $0x18] sm:$0xf]
  %v258 = vld [vmem:[%s2 + $0x1c] sm:$0xf]
  %v259 = vld [vmem:[%s2 + $0x20] sm:$0xf]
  %v260 = vld [vmem:[%s2 + $0x24] sm:$0xf]
  %v261 = vld [vmem:[%s2 + $0x28] sm:$0xf]
  %v262 = vld [vmem:[%s2 + $0x2c] sm:$0xf]
  %v263 = vld [vmem:[%s2 + $0x30] sm:$0xf]
  %v264 = vld [vmem:[%s2 + $0x34] sm:$0xf]
  %v265 = vld [vmem:[%s2 + $0x38] sm:$0xf]
  %v266 = vld [vmem:[%s2 + $0x3c] sm:$0xf]
  %v267 = vld [vmem:[%s3] sm:$0x1]
  %v269 = vlaneseq
  %v270 = vshrl.u32 %v269, 7
  %v271 = vsub.s32 0, %v270
  %v272 = vrot.slane %v267, %v271
  %v290 = vunpack.c.l.b16 %v251
  %v291 = vunpack.c.l.b16 %v252
  %v292 = vunpack.c.l.b16 %v253
  %v293 = vunpack.c.l.b16 %v254
  %v294 = vunpack.c.l.b16 %v255
  %v295 = vunpack.c.l.b16 %v256
  %v296 = vunpack.c.l.b16 %v257
  %v297 = vunpack.c.l.b16 %v258
  %v298 = vunpack.c.l.b16 %v259
  %v299 = vunpack.c.l.b16 %v260
  %v300 = vunpack.c.l.b16 %v261
  %v301 = vunpack.c.l.b16 %v262
  %v302 = vunpack.c.l.b16 %v263
  %v303 = vunpack.c.l.b16 %v264
  %v304 = vunpack.c.l.b16 %v265
  %v305 = vunpack.c.l.b16 %v266
  %v306 = vpack.c.b16 %v291, %v290
  %v307 = vpack.c.b16 %v293, %v292
  %v308 = vpack.c.b16 %v295, %v294
  %v309 = vpack.c.b16 %v297, %v296
  %v310 = vpack.c.b16 %v299, %v298
  %v311 = vpack.c.b16 %v301, %v300
  %v312 = vpack.c.b16 %v303, %v302
  %v313 = vpack.c.b16 %v305, %v304
  %322 = vmatprep.subr.bf16.mxu0 0
  %323 = vmatpush1.bf16.msra.mxu0 %v306
  %324 = vmatprep.subr.bf16.mxu0 0
  %325 = vmatpush1.bf16.msra.mxu0 %v307
  %326 = vmatprep.subr.bf16.mxu0 0
  %327 = vmatpush1.bf16.msra.mxu0 %v308
  %328 = vmatprep.subr.bf16.mxu0 0
  %329 = vmatpush1.bf16.msra.mxu0 %v309
  %330 = vmatprep.subr.bf16.mxu0 0
  %331 = vmatpush1.bf16.msra.mxu0 %v310
  %332 = vmatprep.subr.bf16.mxu0 0
  %333 = vmatpush1.bf16.msra.mxu0 %v311
  %334 = vmatprep.subr.bf16.mxu0 0
  %335 = vmatpush1.bf16.msra.mxu0 %v312
  %336 = vmatprep.subr.bf16.mxu0 0
  %337 = vmatpush1.bf16.msra.mxu0 %v313
  %338 = vmatprep.subr.bf16.mxu0 0
  %339 = vmatpush1.bf16.msra.mxu0 0
  %340 = vmatprep.subr.bf16.mxu0 0
  %341 = vmatpush1.bf16.msra.mxu0 0
  %342 = vmatprep.subr.bf16.mxu0 0
  %343 = vmatpush1.bf16.msra.mxu0 0
  %344 = vmatprep.subr.bf16.mxu0 0
  %345 = vmatpush1.bf16.msra.mxu0 0
  %346 = vmatprep.subr.bf16.mxu0 0
  %347 = vmatpush1.bf16.msra.mxu0 0
  %348 = vmatprep.subr.bf16.mxu0 0
  %349 = vmatpush1.bf16.msra.mxu0 0
  %350 = vmatprep.subr.bf16.mxu0 0
  %351 = vmatpush1.bf16.msra.mxu0 0
  %352 = vmatprep.subr.bf16.mxu0 0
  %353 = vmatpush1.bf16.msra.mxu0 0
  %354 = vmatprep.mubr.bf16.mxu0 0
  %355 = vmatmul.mubr.bf16.gmra.mrb[0].mxu0 %v243
  %v356 = vpop.f32.mrb[0].mxu0
  %v357 = vadd.f32 %v272, %v356
  %v358 = vpop.f32.mrb[0].mxu0
  %v359 = vpop.f32.mrb[0].mxu0
  %v360 = vadd.f32 %v272, %v359
  %v361 = vpop.f32.mrb[0].mxu0
  %362 = vmatprep.mubr.bf16.mxu0 0
  %363 = vmatmul.mubr.bf16.gmra.mrb[0].mxu0 %v244
  %v364 = vpop.f32.mrb[0].mxu0
  %v365 = vadd.f32 %v272, %v364
  %v366 = vpop.f32.mrb[0].mxu0
  %v367 = vpop.f32.mrb[0].mxu0
  %v368 = vadd.f32 %v272, %v367
  %v369 = vpop.f32.mrb[0].mxu0
  %370 = vmatprep.mubr.bf16.mxu0 0
  %371 = vmatmul.mubr.bf16.gmra.mrb[0].mxu0 %v245
  %v372 = vpop.f32.mrb[0].mxu0
  %v373 = vadd.f32 %v272, %v372
  %v374 = vpop.f32.mrb[0].mxu0
  %v375 = vpop.f32.mrb[0].mxu0
  %v376 = vadd.f32 %v272, %v375
  %v377 = vpop.f32.mrb[0].mxu0
  %378 = vmatprep.mubr.bf16.mxu0 0
  %379 = vmatmul.mubr.bf16.gmra.mrb[0].mxu0 %v246
  %v380 = vpop.f32.mrb[0].mxu0
  %v381 = vadd.f32 %v272, %v380
  %v382 = vpop.f32.mrb[0].mxu0
  %v383 = vpop.f32.mrb[0].mxu0
  %v384 = vadd.f32 %v272, %v383
  %v385 = vpop.f32.mrb[0].mxu0
  %386 = vmatprep.mubr.bf16.mxu0 0
  %387 = vmatmul.mubr.bf16.gmra.mrb[0].mxu0 %v247
  %v388 = vpop.f32.mrb[0].mxu0
  %v389 = vadd.f32 %v272, %v388
  %v390 = vpop.f32.mrb[0].mxu0
  %v391 = vpop.f32.mrb[0].mxu0
  %v392 = vadd.f32 %v272, %v391
  %v393 = vpop.f32.mrb[0].mxu0
  %394 = vmatprep.mubr.bf16.mxu0 0
  %395 = vmatmul.mubr.bf16.gmra.mrb[0].mxu0 %v248
  %v396 = vpop.f32.mrb[0].mxu0
  %v397 = vadd.f32 %v272, %v396
  %v398 = vpop.f32.mrb[0].mxu0
  %v399 = vpop.f32.mrb[0].mxu0
  %v400 = vadd.f32 %v272, %v399
  %v401 = vpop.f32.mrb[0].mxu0
  %402 = vmatprep.mubr.bf16.mxu0 0
  %403 = vmatmul.mubr.bf16.gmra.mrb[0].mxu0 %v249
  %v404 = vpop.f32.mrb[0].mxu0
  %v405 = vadd.f32 %v272, %v404
  %v406 = vpop.f32.mrb[0].mxu0
  %v407 = vpop.f32.mrb[0].mxu0
  %v408 = vadd.f32 %v272, %v407
  %v409 = vpop.f32.mrb[0].mxu0
  %410 = vmatprep.mubr.bf16.mxu0 0
  %411 = vmatmul.mubr.bf16.gmra.mrb[0].mxu0 %v250
  %v412 = vpop.f32.mrb[0].mxu0
  %v413 = vadd.f32 %v272, %v412
  %v414 = vpop.f32.mrb[0].mxu0
  %v415 = vpop.f32.mrb[0].mxu0
  %v416 = vadd.f32 %v272, %v415
  %v417 = vpop.f32.mrb[0].mxu0
  %418 = vdwg.mxu0
  %419 = vst [vmem:[%s4] sm:$0xff] %v357
  %420 = vst [vmem:[%s4 + $0x8] sm:$0xff] %v360
  %421 = vst [vmem:[%s4 + $0x10] sm:$0xff] %v365
  %422 = vst [vmem:[%s4 + $0x18] sm:$0xff] %v368
  %423 = vst [vmem:[%s4 + $0x20] sm:$0xff] %v373
  %424 = vst [vmem:[%s4 + $0x28] sm:$0xff] %v376
  %425 = vst [vmem:[%s4 + $0x30] sm:$0xff] %v381
  %426 = vst [vmem:[%s4 + $0x38] sm:$0xff] %v384
  %427 = vst [vmem:[%s4 + $0x40] sm:$0xff] %v389
  %428 = vst [vmem:[%s4 + $0x48] sm:$0xff] %v392
  %429 = vst [vmem:[%s4 + $0x50] sm:$0xff] %v397
  %430 = vst [vmem:[%s4 + $0x58] sm:$0xff] %v400
  %431 = vst [vmem:[%s4 + $0x60] sm:$0xff] %v405
  %432 = vst [vmem:[%s4 + $0x68] sm:$0xff] %v408
  %433 = vst [vmem:[%s4 + $0x70] sm:$0xff] %v413
  %434 = vst [vmem:[%s4 + $0x78] sm:$0xff] %v416
  // Predicated region
  $region18: #{gcn_forward.1} parent=0 // pred_check
    _
  $region19: #{gcn_forward.1} parent=0 // pred_check_branch
    %436 = sbr.rel (0) target = $region21
  $region20: #{gcn_forward.1} parent=0 // pred_region
    _
  $region21: #{gcn_forward.1} parent=0 // pred_fallthru
    _
  // Predicated region
  $region22: #{gcn_forward.1} parent=0 // pred_check
    _
  $region23: #{gcn_forward.1} parent=0 // pred_check_branch
    %438 = sbr.rel (0) target = $region25
  $region24: #{gcn_forward.1} parent=0 // pred_region
    _
  $region25: #{gcn_forward.1} parent=0 // pred_fallthru
    _

</llo_original>
